<compile_context>
chip_gen: v5e
topology: v5e:2x2
jax: 0.10.0
libtpu: 0.0.40
codegen_flags: <defaults>
</compile_context>

<pallas_src>
import jax
import jax.numpy as jnp
from jax.experimental import pallas as pl
from jax.experimental.pallas import tpu as pltpu


def _round_up(x, m):
    return ((x + m - 1) // m) * m


def _vmem_capacity_bytes(default=64 * 1024 * 1024):
    """Per-generation VMEM capacity (v5e/v6e: 128 MiB, v7x: 64 MiB)."""
    try:
        cap = getattr(pltpu.get_tpu_info(), "vmem_capacity_bytes", None)
        if cap:
            return int(cap)
    except Exception:
        pass
    return default


# ---------------------------------------------------------------------------
# Pallas kernels
# ---------------------------------------------------------------------------
def _hswish_store(y, o_ref):
    # hswish(y) = y * relu6(y + 3) / 6, computed in f32, cast at the store.
    o_ref[...] = (y * jnp.clip(y + 3.0, 0.0, 6.0) * (1.0 / 6.0)).astype(o_ref.dtype)


def _conv_bn_hswish_kernel(p_ref, w_ref, b_ref, o_ref):
    # Single-k path: whole contraction in one MXU pass, fused f32 epilogue.
    # p_ref: (tm, CKK) bf16   w_ref: (CKK, tn) bf16 (BN scale folded)
    # b_ref: (1, tn)  f32     o_ref: (tm, tn)
    acc = jnp.dot(p_ref[...], w_ref[...], preferred_element_type=jnp.float32)
    _hswish_store(acc + b_ref[...], o_ref)


def _conv_bn_hswish_kernel_ksplit(p_ref, w_ref, b_ref, o_ref, acc_ref):
    # CKK split across the last ("arbitrary") grid axis; f32 accumulator.
    k = pl.program_id(2)

    @pl.when(k == 0)
    def _():
        acc_ref[...] = jnp.zeros_like(acc_ref)

    acc_ref[...] += jnp.dot(p_ref[...], w_ref[...],
                            preferred_element_type=jnp.float32)

    @pl.when(k == pl.num_programs(2) - 1)
    def _():
        _hswish_store(acc_ref[...] + b_ref[...], o_ref)


# ---------------------------------------------------------------------------
# Wrapper
# ---------------------------------------------------------------------------
def conv_bn_hswish(x, weight, gamma, beta, running_mean, running_var,
                   *, stride=1, padding=1, dilation=1, groups=1, eps=1e-5,
                   tm=None, out_dtype=None):
    """x: (N, C_in, H, W) NCHW.  weight: (C_out, C_in, KH, KW).  Returns NCHW.

    Equivalent to Conv2d(bias=False) -> BatchNorm2d(eval) -> HardSwish.
    Only groups=1, dilation=1 are supported.
    """
    if dilation != 1 or groups != 1:
        raise NotImplementedError("conv_bn_hswish: only dilation=1, groups=1 supported")

    N, C_in, H, W = x.shape
    C_out, C_in_w, KH, KW = weight.shape
    assert C_in_w == C_in, "channel mismatch (grouped conv not supported)"

    H_out = (H + 2 * padding - KH) // stride + 1
    W_out = (W + 2 * padding - KW) // stride + 1
    M = N * H_out * W_out
    CKK = C_in * KH * KW

    in_dtype = x.dtype
    if out_dtype is None:
        out_dtype = in_dtype
    out_itemsize = jnp.dtype(out_dtype).itemsize

    # ---- glue: im2col directly in bf16 NHWC (features land in last dim) -----
    x_nhwc = jnp.transpose(x, (0, 2, 3, 1)).astype(jnp.bfloat16)   # (N,H,W,Cin)
    xp = jnp.pad(x_nhwc, ((0, 0), (padding, padding), (padding, padding), (0, 0)))
    taps = []
    for kh in range(KH):
        for kw in range(KW):
            taps.append(
                xp[:, kh:kh + stride * H_out:stride,
                   kw:kw + stride * W_out:stride, :]
            )                                                      # (N,Hout,Wout,Cin)
    # feature index = (kh*KW + kw)*C_in + c
    patches = jnp.stack(taps, axis=3).reshape(M, CKK)              # bf16

    # ---- glue: fold BN scale into the f32 weight; bias goes to the epilogue -
    # (for scale-sensitive layers the fold could instead be kept in the f32
    #  epilogue to avoid amplifying bf16 weight quantization)
    scale = gamma / jnp.sqrt(running_var + eps)                    # (C_out,)
    bias = beta - running_mean * scale                             # (C_out,)
    w2d = weight.astype(jnp.float32).transpose(2, 3, 1, 0).reshape(CKK, C_out)
    w2d = w2d * scale[None, :]

    # ---- tiling ---------------------------------------------------------------
    m8 = _round_up(M, 8)
    if tm is None:
        if m8 <= 1024:
            # tiny layer: 1-2 big tiles
            tm = max(8, min(512, _round_up(-(-m8 // 2), 8)))
        elif m8 >= 8 * 512:
            tm = 512           # >= 8 grid steps, multiple of 256 (fills 256-wide MXU)
        else:
            tm = 256
    else:
        tm = _round_up(min(tm, m8), 8)   # honour the (8,128) block constraint

    cout_pad = _round_up(C_out, 128)
    tn = cout_pad if cout_pad <= 256 else 256     # cout tiling for wide layers

    if CKK <= 2048:
        tk = CKK                                  # full-extent block: no HBM pad
        ckk_pad = CKK
    else:
        tk = 1024                                 # CKK reduction grid axis
        ckk_pad = _round_up(CKK, tk)

    m_pad = _round_up(M, tm)
    m_tiles, n_tiles, k_tiles = m_pad // tm, cout_pad // tn, ckk_pad // tk

    # ---- pad operands (zeros are exact for the matmul) ------------------------
    patches_p = jnp.pad(patches, ((0, m_pad - M), (0, ckk_pad - CKK)))
    w_p = jnp.pad(w2d, ((0, ckk_pad - CKK), (0, cout_pad - C_out))).astype(jnp.bfloat16)
    bias_p = jnp.pad(bias.astype(jnp.float32).reshape(1, C_out),
                     ((0, 0), (0, cout_pad - C_out)))

    # ---- honest VMEM budget, capped per generation -----------------------------
    vmem_need = (2 * tm * tk * 2                    # patch tiles (bf16, double-buf)
                 + 2 * tk * tn * 2                  # weight tiles (bf16, double-buf)
                 + 2 * tn * 4                       # bias row (f32)
                 + 2 * tm * tn * out_itemsize       # output tiles
                 + (tm * tn * 4 if k_tiles > 1 else 0))   # f32 accumulator
    vmem_cap = _vmem_capacity_bytes()
    vmem_limit = int(min(max(2 * vmem_need, 32 * 1024 * 1024), int(0.85 * vmem_cap)))
    vmem_limit = max(vmem_limit, int(1.25 * vmem_need))

    cost = pl.CostEstimate(
        flops=2 * m_pad * ckk_pad * cout_pad,
        transcendentals=0,
        bytes_accessed=int(patches_p.size * 2 + w_p.size * 2 + bias_p.size * 4
                           + m_pad * cout_pad * out_itemsize),
    )

    if k_tiles == 1:
        grid = (m_tiles, n_tiles)
        in_specs = [
            pl.BlockSpec((tm, tk), lambda i, j: (i, 0)),
            pl.BlockSpec((tk, tn), lambda i, j: (0, j)),
            pl.BlockSpec((1, tn), lambda i, j: (0, j)),
        ]
        out_specs = pl.BlockSpec((tm, tn), lambda i, j: (i, j))
        scratch_shapes = []
        kernel = _conv_bn_hswish_kernel
        dim_sem = ("parallel", "parallel")
    else:
        grid = (m_tiles, n_tiles, k_tiles)
        in_specs = [
            pl.BlockSpec((tm, tk), lambda i, j, k: (i, k)),
            pl.BlockSpec((tk, tn), lambda i, j, k: (k, j)),
            pl.BlockSpec((1, tn), lambda i, j, k: (0, j)),
        ]
        out_specs = pl.BlockSpec((tm, tn), lambda i, j, k: (i, j))
        scratch_shapes = [pltpu.VMEM((tm, tn), jnp.float32)]
        kernel = _conv_bn_hswish_kernel_ksplit
        dim_sem = ("parallel", "parallel", "arbitrary")

    out2d = pl.pallas_call(
        kernel,
        out_shape=jax.ShapeDtypeStruct((m_pad, cout_pad), out_dtype),
        grid_spec=pltpu.PrefetchScalarGridSpec(
            num_scalar_prefetch=0,
            grid=grid,
            in_specs=in_specs,
            out_specs=out_specs,
            scratch_shapes=scratch_shapes,
        ),
        compiler_params=pltpu.CompilerParams(
            dimension_semantics=dim_sem,
            vmem_limit_bytes=vmem_limit,
        ),
        cost_estimate=cost,
    )(patches_p, w_p, bias_p)

    out = out2d[:M, :C_out].reshape(N, H_out, W_out, C_out)
    # NHWC -> NCHW to match the PyTorch module's layout.
    # TODO(synk): skip this transpose when the consumer accepts NHWC (it costs
    #             a full extra HBM round-trip of the output for mem-bound layers).
    return jnp.transpose(out, (0, 3, 1, 2))


# ---------------------------------------------------------------------------
# Pure-JAX reference for correctness check
# ---------------------------------------------------------------------------
def _reference(x, weight, gamma, beta, running_mean, running_var,
               *, stride=1, padding=1, eps=1e-5):
    y = jax.lax.conv_general_dilated(
        x, weight,
        window_strides=(stride, stride),
        padding=((padding, padding), (padding, padding)),
        dimension_numbers=("NCHW", "OIHW", "NCHW"),
    )
    scale = (gamma / jnp.sqrt(running_var + eps)).reshape(1, -1, 1, 1)
    bias = (beta - running_mean * gamma / jnp.sqrt(running_var + eps)).reshape(1, -1, 1, 1)
    y = y * scale + bias
    return y * jnp.clip(y + 3.0, 0.0, 6.0) * (1.0 / 6.0)


if __name__ == "__main__":
    key = jax.random.PRNGKey(0)
    k1, k2, k3, k4, k5, k6 = jax.random.split(key, 6)

    # small MobileNetV3-ish shapes: N=2, C_in=4, H=W=16, C_out=8, 3x3 s1 p1
    N, C_in, H, W = 2, 4, 16, 16
    C_out, K = 8, 3

    x = jax.random.normal(k1, (N, C_in, H, W), dtype=jnp.float32)
    weight = jax.random.normal(k2, (C_out, C_in, K, K), dtype=jnp.float32) * 0.1
    gamma = jax.random.normal(k3, (C_out,), dtype=jnp.float32) * 0.1 + 1.0
    beta = jax.random.normal(k4, (C_out,), dtype=jnp.float32) * 0.1
    running_mean = jax.random.normal(k5, (C_out,), dtype=jnp.float32) * 0.1
    running_var = jax.random.uniform(k6, (C_out,), dtype=jnp.float32,
                                     minval=0.5, maxval=1.5)

    # config 1: stride=1, padding=1
    out = conv_bn_hswish(x, weight, gamma, beta, running_mean, running_var,
                         stride=1, padding=1)
    out = jax.block_until_ready(out)
    ref = _reference(x, weight, gamma, beta, running_mean, running_var,
                     stride=1, padding=1)
    assert out.shape == (N, C_out, H, W)
    # bf16 operands (f32 accumulation) -> tolerance loosened vs a pure-f32 path
    assert jnp.allclose(out, ref, atol=5e-2, rtol=5e-2), "mismatch vs reference (s1)"

    # config 2: stride=2, padding=1 (exercises strided im2col + odd tiles)
    out2 = conv_bn_hswish(x, weight, gamma, beta, running_mean, running_var,
                          stride=2, padding=1)
    out2 = jax.block_until_ready(out2)
    ref2 = _reference(x, weight, gamma, beta, running_mean, running_var,
                      stride=2, padding=1)
    assert out2.shape == ref2.shape
    assert jnp.allclose(out2, ref2, atol=5e-2, rtol=5e-2), "mismatch vs reference (s2)"

    print("KERNEL_OK")
</pallas_src>

<mosaic_0001>
module attributes {stable_mosaic.version = 11 : i64} {
  func.func @_conv_bn_hswish_kernel(%arg0: i32, %arg1: i32, %arg2: memref<256x36xbf16, #tpu.memory_space<vmem>>, %arg3: memref<36x128xbf16, #tpu.memory_space<vmem>>, %arg4: memref<1x128xf32, #tpu.memory_space<vmem>>, %arg5: memref<256x128xf32, #tpu.memory_space<vmem>>) attributes {dimension_semantics = [#tpu.dimension_semantics<parallel>, #tpu.dimension_semantics<parallel>], iteration_bounds = array<i64: 2, 1>, scalar_prefetch = 0 : i64, scratch_operands = 0 : i64, tpu.core_type = #tpu.core_type<tc>, window_params = [{transform_indices = @transform_0, window_bounds = array<i64: 256, 36>}, {transform_indices = @transform_1, window_bounds = array<i64: 36, 128>}, {transform_indices = @transform_2, window_bounds = array<i64: 1, 128>}, {transform_indices = @transform_3, window_bounds = array<i64: 256, 128>}]} {
    %c0 = arith.constant 0 : index
    %c0_0 = arith.constant 0 : index
    %0 = vector.load %arg2[%c0, %c0_0] : memref<256x36xbf16, #tpu.memory_space<vmem>>, vector<256x36xbf16>
    %c0_1 = arith.constant 0 : index
    %c0_2 = arith.constant 0 : index
    %1 = vector.load %arg3[%c0_1, %c0_2] : memref<36x128xbf16, #tpu.memory_space<vmem>>, vector<36x128xbf16>
    %cst = arith.constant dense<0.000000e+00> : vector<256x128xf32>
    %2 = tpu.matmul %0, %1, %cst {dimension_numbers = #tpu.dot_dimension_numbers<[1], [0], [0], [1], [0, 0, 1, 1], [], []>} : vector<256x36xbf16>, vector<36x128xbf16>, vector<256x128xf32> -> vector<256x128xf32>
    %c0_3 = arith.constant 0 : index
    %c0_4 = arith.constant 0 : index
    %3 = vector.load %arg4[%c0_3, %c0_4] : memref<1x128xf32, #tpu.memory_space<vmem>>, vector<1x128xf32>
    %4 = vector.broadcast %3 : vector<1x128xf32> to vector<256x128xf32>
    %5 = arith.addf %2, %4 : vector<256x128xf32>
    %cst_5 = arith.constant 3.000000e+00 : f32
    %6 = vector.broadcast %cst_5 : f32 to vector<256x128xf32>
    %7 = arith.addf %5, %6 : vector<256x128xf32>
    %cst_6 = arith.constant 0.000000e+00 : f32
    %cst_7 = arith.constant 6.000000e+00 : f32
    %8 = vector.broadcast %cst_6 : f32 to vector<256x128xf32>
    %9 = arith.maximumf %8, %7 : vector<256x128xf32>
    %10 = vector.broadcast %cst_7 : f32 to vector<256x128xf32>
    %11 = arith.minimumf %10, %9 : vector<256x128xf32>
    %12 = arith.mulf %5, %11 : vector<256x128xf32>
    %cst_8 = arith.constant 0.166666672 : f32
    %13 = vector.broadcast %cst_8 : f32 to vector<256x128xf32>
    %14 = arith.mulf %12, %13 : vector<256x128xf32>
    %c0_9 = arith.constant 0 : index
    %c0_10 = arith.constant 0 : index
    %15 = vector.load %arg5[%c0_9, %c0_10] : memref<256x128xf32, #tpu.memory_space<vmem>>, vector<256x128xf32>
    tpu.vector_store %arg5[%c0_9, %c0_10], %14 {strides = array<i32>} : memref<256x128xf32, #tpu.memory_space<vmem>>, vector<256x128xf32>,
    return
  }
  func.func @transform_0(%arg0: i32, %arg1: i32) -> (i32, i32) {
    %c0_i32 = arith.constant 0 : i32
    %c0_i32_0 = arith.constant 0 : i32
    return %arg0, %c0_i32 : i32, i32
  }
  func.func @transform_1(%arg0: i32, %arg1: i32) -> (i32, i32) {
    %c0_i32 = arith.constant 0 : i32
    %c0_i32_0 = arith.constant 0 : i32
    return %c0_i32, %arg1 : i32, i32
  }
  func.func @transform_2(%arg0: i32, %arg1: i32) -> (i32, i32) {
    %c0_i32 = arith.constant 0 : i32
    %c0_i32_0 = arith.constant 0 : i32
    return %c0_i32, %arg1 : i32, i32
  }
  func.func @transform_3(%arg0: i32, %arg1: i32) -> (i32, i32) {
    %c0_i32 = arith.constant 0 : i32
    return %arg0, %arg1 : i32, i32
  }
}

</mosaic_0001>

<llo_original>
// kernel: tpu_custom_call.1
$region0: #{tpu_custom_call.1}
  #allocation0 [shape = 'u32[]', space=smem, size = 0x4, offset = 0x4, fixed_abs, tag = 'smem constant byte address 0x4 - core index']
  #allocation1 [shape = 'u32[72,128]{1,0:T(1,128)}', space=vmem, size = 0x9000, scoped, tag = 'internal scratch']
  %s0 = inlined_call_operand.vmem [shape: bf16[512,36], index: 0, kind: input, shape index: {}]
  %s1 = inlined_call_operand.vmem [shape: bf16[36,128], index: 1, kind: input, shape index: {}]
  %s2 = inlined_call_operand.vmem [shape: f32[1,128], index: 2, kind: input, shape index: {}]
  %s3 = inlined_call_operand.hbm [shape: f32[512,128], index: 3, kind: output, shape index: {}]
  %s4 = sld [smem:[#allocation0]]
  $region45: #{tpu_custom_call.1} parent=0
    _
  %s6 = ssub.s32 1, %s4
  %s7 = scalar_select 0, %s6, %s4
  $region1: #{tpu_custom_call.1} parent=0
    #allocation2 [shape = 'u8[262144]{0}', space=vmem, size = 0x40000, scoped, tag = 'output window, operand 0']
    #allocation3 [shape = 's32[2]{0}', space=sflag, size = 0x8, scoped, tag = 'scoped memory for tpu_custom_call.1']
    %8 = vsyncpa [#allocation3], 0
    %s9 = scalar_lea.sflag [#allocation3], 1
    %10 = vsyncpa %s9, 0
    loop: start=0, step=1, limit=4
    $region2: #{tpu_custom_call.1} parent=1 // loop_pre_header
      _
    $region3: #{tpu_custom_call.1} parent=1 // loop_header
      %s12 = sphi 0, %s16
      %p13 = scmp.ge.s32.totalorder %s12, 4
      %s19 = sphi 0, %s31
      %s20 = sphi 0, %s27
      %s21 = sphi 0, %s19
      %s22 = sphi 0, %s20
      %s23 = sphi 0, %s21
      %s24 = sphi 0, %s22
      %s34 = sphi 0, %s36
      %s37 = sphi 0, %s34
      %s38 = sphi 0, %s37
      %s54 = sphi 0, %s38
      %s60 = sphi 0, %s62
      %s63 = sphi 0, %s60
      %s64 = sphi 0, %s63
      %s80 = sphi 0, %s64
      %s86 = sphi 0, %s88
      %s89 = sphi 0, %s86
      %s90 = sphi 0, %s89
      %s106 = sphi 0, %s90
      %s114 = sphi 0, %s116
      %s117 = sphi 0, %s114
      %s118 = sphi 0, %s117
      %s134 = sphi 0, %s118
    $region4: #{tpu_custom_call.1} parent=1 // loop_header_branch
      %15 = sbr.rel (%p13) target = $region8
    $region5: #{tpu_custom_call.1} parent=1 // loop_body
      %s17 = ssub.s32 %s12, 1
      %s18 = ssub.s32 %s12, 2
      %s25 = sadd.s32 1, %s20
      %p26 = scmp.ge.s32.totalorder %s25, 1
      %s27 = scalar_select %p26, 0, %s25
      %s28 = sadd.s32 1, %s19
      %s29 = scalar_select %p26, %s28, %s19
      %p30 = scmp.ge.s32.totalorder %s29, 2
      %s31 = scalar_select %p30, 0, %s29
      %s32 = ssub.s32 %s19, %s31
      %p33 = scmp.eq.s32.totalorder %s32, 0
      %s35 = sadd.s32 %s34, 1
      %s36 = scalar_select %p33, %s34, %s35
      %p39 = pneg %p33
      %p40 = scmp.eq.s32.totalorder %s12, 1
      %p41 = por %p39, %p40
      %p42 = scmp.ne.s32.totalorder %s34, %s37
      %p43 = scmp.eq.s32.totalorder %s12, 0
      %p44 = por %p42, %p43
      %p45 = scmp.ne.s32.totalorder %s34, %s37
      %p46 = scmp.eq.s32.totalorder %s17, 1
      %p47 = por %p45, %p46
      %p48 = scmp.ne.s32.totalorder %s37, %s38
      %p49 = scmp.eq.s32.totalorder %s17, 0
      %p50 = por %p48, %p49
      %p51 = scmp.ne.s32.totalorder %s37, %s38
      %p52 = scmp.eq.s32.totalorder %s18, 1
      %p53 = por %p51, %p52
      %p55 = scmp.ne.s32.totalorder %s38, %s54
      %p56 = scmp.eq.s32.totalorder %s18, 0
      %p57 = por %p55, %p56
      %s58 = ssub.s32 %s20, %s27
      %p59 = scmp.eq.s32.totalorder %s58, 0
      %s61 = sadd.s32 %s60, 1
      %s62 = scalar_select %p59, %s60, %s61
      %p65 = pneg %p59
      %p66 = scmp.eq.s32.totalorder %s12, 1
      %p67 = por %p65, %p66
      %p68 = scmp.ne.s32.totalorder %s60, %s63
      %p69 = scmp.eq.s32.totalorder %s12, 0
      %p70 = por %p68, %p69
      %p71 = scmp.ne.s32.totalorder %s60, %s63
      %p72 = scmp.eq.s32.totalorder %s17, 1
      %p73 = por %p71, %p72
      %p74 = scmp.ne.s32.totalorder %s63, %s64
      %p75 = scmp.eq.s32.totalorder %s17, 0
      %p76 = por %p74, %p75
      %p77 = scmp.ne.s32.totalorder %s63, %s64
      %p78 = scmp.eq.s32.totalorder %s18, 1
      %p79 = por %p77, %p78
      %p81 = scmp.ne.s32.totalorder %s64, %s80
      %p82 = scmp.eq.s32.totalorder %s18, 0
      %p83 = por %p81, %p82
      %s84 = ssub.s32 %s20, %s27
      %p85 = scmp.eq.s32.totalorder %s84, 0
      %s87 = sadd.s32 %s86, 1
      %s88 = scalar_select %p85, %s86, %s87
      %p91 = pneg %p85
      %p92 = scmp.eq.s32.totalorder %s12, 1
      %p93 = por %p91, %p92
      %p94 = scmp.ne.s32.totalorder %s86, %s89
      %p95 = scmp.eq.s32.totalorder %s12, 0
      %p96 = por %p94, %p95
      %p97 = scmp.ne.s32.totalorder %s86, %s89
      %p98 = scmp.eq.s32.totalorder %s17, 1
      %p99 = por %p97, %p98
      %p100 = scmp.ne.s32.totalorder %s89, %s90
      %p101 = scmp.eq.s32.totalorder %s17, 0
      %p102 = por %p100, %p101
      %p103 = scmp.ne.s32.totalorder %s89, %s90
      %p104 = scmp.eq.s32.totalorder %s18, 1
      %p105 = por %p103, %p104
      %p107 = scmp.ne.s32.totalorder %s90, %s106
      %p108 = scmp.eq.s32.totalorder %s18, 0
      %p109 = por %p107, %p108
      %s110 = ssub.s32 %s19, %s31
      %s111 = ssub.s32 %s20, %s27
      %s112 = sor.u32 %s110, %s111
      %p113 = scmp.eq.s32.totalorder %s112, 0
      %s115 = sadd.s32 %s114, 1
      %s116 = scalar_select %p113, %s114, %s115
      %p119 = pneg %p113
      %p120 = scmp.eq.s32.totalorder %s12, 1
      %p121 = por %p119, %p120
      %p122 = scmp.ne.s32.totalorder %s114, %s117
      %p123 = scmp.eq.s32.totalorder %s12, 0
      %p124 = por %p122, %p123
      %p125 = scmp.ne.s32.totalorder %s114, %s117
      %p126 = scmp.eq.s32.totalorder %s17, 1
      %p127 = por %p125, %p126
      %p128 = scmp.ne.s32.totalorder %s117, %s118
      %p129 = scmp.eq.s32.totalorder %s17, 0
      %p130 = por %p128, %p129
      %p131 = scmp.ne.s32.totalorder %s117, %s118
      %p132 = scmp.eq.s32.totalorder %s18, 1
      %p133 = por %p131, %p132
      %p135 = scmp.ne.s32.totalorder %s118, %s134
      %p136 = scmp.eq.s32.totalorder %s18, 0
      %p137 = por %p135, %p136
      %p138 = scmp.le.s32.totalorder 1, %s12
      %p139 = scmp.lt.s32.totalorder %s12, 3
      %p140 = pnand %p138, %p139
      %p141 = pneg %p140
      // Predicated region
      $region9: #{tpu_custom_call.1} parent=5 // pred_check
        _
      $region10: #{tpu_custom_call.1} parent=5 // pred_check_branch
        %143 = sbr.rel (%p140) target = $region12
      $region11: #{tpu_custom_call.1} parent=5 // pred_region
        %s144 = ssub.s32 %s12, 1
        // Predicated region
        $region13: #{tpu_custom_call.1} parent=11 // pred_check
          %p145 = pneg %p76
        $region14: #{tpu_custom_call.1} parent=11 // pred_check_branch
          %147 = sbr.rel (%p145) target = $region16
        $region15: #{tpu_custom_call.1} parent=11 // pred_region
          %p148 = scmp.lt.s32.totalorder %s22, 0
          %s149 = scalar_select %p148, %s22, 0
          %s150 = smul.addr %s149, 4
          %s151 = scalar_lea.vmem %s1, %s150
        $region16: #{tpu_custom_call.1} parent=11 // pred_fallthru
          _
        // Predicated region
        $region17: #{tpu_custom_call.1} parent=11 // pred_check
          %p152 = pneg %p102
        $region18: #{tpu_custom_call.1} parent=11 // pred_check_branch
          %154 = sbr.rel (%p152) target = $region20
        $region19: #{tpu_custom_call.1} parent=11 // pred_region
          %p155 = scmp.lt.s32.totalorder %s22, 0
          %s156 = scalar_select %p155, %s22, 0
          %s157 = scalar_lea.vmem %s2, %s156
        $region20: #{tpu_custom_call.1} parent=11 // pred_fallthru
          _
      $region12: #{tpu_custom_call.1} parent=5 // pred_fallthru
        _
      %p158 = scmp.lt.s32.totalorder %s12, 2
      // Predicated region
      $region21: #{tpu_custom_call.1} parent=5 // pred_check
        %p159 = pneg %p158
      $region22: #{tpu_custom_call.1} parent=5 // pred_check_branch
        %161 = sbr.rel (%p159) target = $region24
      $region23: #{tpu_custom_call.1} parent=5 // pred_region
        // Predicated region
        $region25: #{tpu_custom_call.1} parent=23 // pred_check
          %p162 = pneg %p44
        $region26: #{tpu_custom_call.1} parent=23 // pred_check_branch
          %164 = sbr.rel (%p162) target = $region28
        $region27: #{tpu_custom_call.1} parent=23 // pred_region
          %s165 = smul.u32 32, %s19
          %p166 = scmp.lt.s32.totalorder %s165, 63
          %s167 = scalar_select %p166, %s165, 63
          %s168 = smul.addr %s167, 4
          %s169 = scalar_lea.vmem %s0, %s168
          %s170 = smul.u32 32, %s19
        $region28: #{tpu_custom_call.1} parent=23 // pred_fallthru
          _
      $region24: #{tpu_custom_call.1} parent=5 // pred_fallthru
        _
      %p171 = scmp.le.s32.totalorder 1, %s12
      %p172 = scmp.lt.s32.totalorder %s12, 3
      %p173 = pnand %p171, %p172
      %p174 = pneg %p173
      // Predicated region
      $region29: #{tpu_custom_call.1} parent=5 // pred_check
        _
      $region30: #{tpu_custom_call.1} parent=5 // pred_check_branch
        %176 = sbr.rel (%p173) target = $region32
      $region31: #{tpu_custom_call.1} parent=5 // pred_region
        %s177 = ssub.s32 %s12, 1
        %s178 = smul.u32 32, %s21
        %p179 = scmp.lt.s32.totalorder %s178, 63
        %s180 = scalar_select %p179, %s178, 63
        %s181 = smul.addr %s180, 4
        %s182 = scalar_lea.vmem %s0, %s181
        %p183 = pneg %p50
        %p184 = pneg %p47
        %p185 = scmp.lt.s32.totalorder %s22, 0
        %s186 = scalar_select %p185, %s22, 0
        %s187 = smul.addr %s186, 4
        %s188 = scalar_lea.vmem %s1, %s187
        %p189 = pneg %p76
        %p190 = pneg %p73
        %p191 = scmp.lt.s32.totalorder %s22, 0
        %s192 = scalar_select %p191, %s22, 0
        %s193 = scalar_lea.vmem %s2, %s192
        %p194 = pneg %p102
        %p195 = pneg %p99
        %p196 = pneg %p130
        %p197 = pneg %p127
        %s198 = sand.u32 %s117, 1
        %s199 = scalar_lea.sflag [#allocation3], %s198
        %s200 = sand.u32 %s117, 1
        %s201 = smul.addr %s200, 256
        %s202 = scalar_lea.vmem [#allocation2], %s201
        %s203 = smul.u32 32, %s21
        %p204 = scmp.lt.s32.totalorder %s203, 63
        %s205 = scalar_select %p204, %s203, 63
        %s206 = smul.addr %s205, 4
        %s207 = scalar_lea.vmem %s0, %s206
        %s208 = smul.u32 32, %s21
        %p209 = scmp.lt.s32.totalorder %s22, 0
        %s210 = scalar_select %p209, %s22, 0
        %s211 = smul.addr %s210, 4
        %s212 = scalar_lea.vmem %s1, %s211
        %p213 = scmp.lt.s32.totalorder %s22, 0
        %s214 = scalar_select %p213, %s22, 0
        %s215 = scalar_lea.vmem %s2, %s214
        %s216 = smul.u32 32, %s21
        %v218 = vld [vmem:[%s207] sm:$0xf]
        %v219 = vld [vmem:[%s207 + $0x4] sm:$0xf]
        %v220 = vld [vmem:[%s207 + $0x8] sm:$0xf]
        %v221 = vld [vmem:[%s207 + $0xc] sm:$0xf]
        %v222 = vld [vmem:[%s207 + $0x10] sm:$0xf]
        %v223 = vld [vmem:[%s207 + $0x14] sm:$0xf]
        %v224 = vld [vmem:[%s207 + $0x18] sm:$0xf]
        %v225 = vld [vmem:[%s207 + $0x1c] sm:$0xf]
        %v226 = vld [vmem:[%s207 + $0x20] sm:$0xf]
        %v227 = vld [vmem:[%s207 + $0x24] sm:$0xf]
        %v228 = vld [vmem:[%s207 + $0x28] sm:$0xf]
        %v229 = vld [vmem:[%s207 + $0x2c] sm:$0xf]
        %v230 = vld [vmem:[%s207 + $0x30] sm:$0xf]
        %v231 = vld [vmem:[%s207 + $0x34] sm:$0xf]
        %v232 = vld [vmem:[%s207 + $0x38] sm:$0xf]
        %v233 = vld [vmem:[%s207 + $0x3c] sm:$0xf]
        %v234 = vld [vmem:[%s207 + $0x40] sm:$0xf]
        %v235 = vld [vmem:[%s207 + $0x44] sm:$0xf]
        %v236 = vld [vmem:[%s207 + $0x48] sm:$0xf]
        %v237 = vld [vmem:[%s207 + $0x4c] sm:$0xf]
        %v238 = vld [vmem:[%s207 + $0x50] sm:$0xf]
        %v239 = vld [vmem:[%s207 + $0x54] sm:$0xf]
        %v240 = vld [vmem:[%s207 + $0x58] sm:$0xf]
        %v241 = vld [vmem:[%s207 + $0x5c] sm:$0xf]
        %v242 = vld [vmem:[%s207 + $0x60] sm:$0xf]
        %v243 = vld [vmem:[%s207 + $0x64] sm:$0xf]
        %v244 = vld [vmem:[%s207 + $0x68] sm:$0xf]
        %v245 = vld [vmem:[%s207 + $0x6c] sm:$0xf]
        %v246 = vld [vmem:[%s207 + $0x70] sm:$0xf]
        %v247 = vld [vmem:[%s207 + $0x74] sm:$0xf]
        %v248 = vld [vmem:[%s207 + $0x78] sm:$0xf]
        %v249 = vld [vmem:[%s207 + $0x7c] sm:$0xf]
        %v250 = vld [vmem:[%s212] sm:$0xf]
        %v251 = vld [vmem:[%s212 + $0x4] sm:$0xf]
        %v252 = vld [vmem:[%s212 + $0x8] sm:$0xf]
        %v253 = vld [vmem:[%s212 + $0xc] sm:$0xf]
        %v254 = vld [vmem:[%s212 + $0x10] sm:$0x3]
        %v255 = vld [vmem:[%s215] sm:$0x1]
        %v257 = vperm.slane %v255, 0
        %v291 = vunpack.c.l.b16 %v218
        %v292 = vunpack.c.l.b16 %v219
        %v293 = vunpack.c.l.b16 %v220
        %v294 = vunpack.c.l.b16 %v221
        %v295 = vunpack.c.l.b16 %v222
        %v296 = vunpack.c.l.b16 %v223
        %v297 = vunpack.c.l.b16 %v224
        %v298 = vunpack.c.l.b16 %v225
        %v299 = vunpack.c.l.b16 %v226
        %v300 = vunpack.c.l.b16 %v227
        %v301 = vunpack.c.l.b16 %v228
        %v302 = vunpack.c.l.b16 %v229
        %v303 = vunpack.c.l.b16 %v230
        %v304 = vunpack.c.l.b16 %v231
        %v305 = vunpack.c.l.b16 %v232
        %v306 = vunpack.c.l.b16 %v233
        %v307 = vunpack.c.l.b16 %v234
        %v308 = vunpack.c.l.b16 %v235
        %v309 = vunpack.c.l.b16 %v236
        %v310 = vunpack.c.l.b16 %v237
        %v311 = vunpack.c.l.b16 %v238
        %v312 = vunpack.c.l.b16 %v239
        %v313 = vunpack.c.l.b16 %v240
        %v314 = vunpack.c.l.b16 %v241
        %v315 = vunpack.c.l.b16 %v242
        %v316 = vunpack.c.l.b16 %v243
        %v317 = vunpack.c.l.b16 %v244
        %v318 = vunpack.c.l.b16 %v245
        %v319 = vunpack.c.l.b16 %v246
        %v320 = vunpack.c.l.b16 %v247
        %v321 = vunpack.c.l.b16 %v248
        %v322 = vunpack.c.l.b16 %v249
        %v323 = vpack.c.b16 %v292, %v291
        %v324 = vpack.c.b16 %v294, %v293
        %v325 = vpack.c.b16 %v296, %v295
        %v326 = vpack.c.b16 %v298, %v297
        %v327 = vpack.c.b16 %v300, %v299
        %v328 = vpack.c.b16 %v302, %v301
        %v329 = vpack.c.b16 %v304, %v303
        %v330 = vpack.c.b16 %v306, %v305
        %v331 = vpack.c.b16 %v308, %v307
        %v332 = vpack.c.b16 %v310, %v309
        %v333 = vpack.c.b16 %v312, %v311
        %v334 = vpack.c.b16 %v314, %v313
        %v335 = vpack.c.b16 %v316, %v315
        %v336 = vpack.c.b16 %v318, %v317
        %v337 = vpack.c.b16 %v320, %v319
        %v338 = vpack.c.b16 %v322, %v321
        %v344 = vunpack.c.l.b16 %v250
        %v345 = vunpack.c.l.b16 %v251
        %v346 = vunpack.c.l.b16 %v252
        %v347 = vunpack.c.l.b16 %v253
        %v348 = vunpack.c.l.b16 %v254
        %v349 = vpack.c.b16 %v345, %v344
        %v350 = vpack.c.b16 %v347, %v346
        %v351 = vpack.c.b16 %v348, %v348
        %vm354 = vcmask 293888
        %v356 = vsel %vm354, %v323, 0
        %v359 = vsel %vm354, %v324, 0
        %v362 = vsel %vm354, %v325, 0
        %v365 = vsel %vm354, %v326, 0
        %v368 = vsel %vm354, %v327, 0
        %v371 = vsel %vm354, %v328, 0
        %v374 = vsel %vm354, %v329, 0
        %v377 = vsel %vm354, %v330, 0
        %v380 = vsel %vm354, %v331, 0
        %v383 = vsel %vm354, %v332, 0
        %v386 = vsel %vm354, %v333, 0
        %v389 = vsel %vm354, %v334, 0
        %v392 = vsel %vm354, %v335, 0
        %v395 = vsel %vm354, %v336, 0
        %v398 = vsel %vm354, %v337, 0
        %v401 = vsel %vm354, %v338, 0
        %vm403 = vcmask 1041408
        %v405 = vsel %vm403, %v351, 0
        %407 = vmatpush.bf16.msra.mxu0 0
        %408 = vmatpush.bf16.msra.mxu0 0
        %409 = vmatpush.bf16.msra.mxu0 0
        %410 = vmatpush.bf16.msra.mxu0 0
        %411 = vmatpush.bf16.msra.mxu0 0
        %412 = vmatpush.bf16.msra.mxu0 %v405
        %413 = vmatpush.bf16.msra.mxu0 %v350
        %414 = vmatpush.bf16.msra.mxu0 %v349
        %415 = vmatmul.bf16.gmra.mxu0 %v356
        %v416 = vpop.f32.mrf.mxu0
        %v417 = vadd.f32 %v257, %v416
        %v418 = vpop.f32.mrf.mxu0
        %v419 = vadd.f32 %v257, %v418
        %420 = vmatmul.bf16.gmra.mxu0 %v359
        %v421 = vpop.f32.mrf.mxu0
        %v422 = vadd.f32 %v257, %v421
        %v423 = vpop.f32.mrf.mxu0
        %v424 = vadd.f32 %v257, %v423
        %425 = vmatmul.bf16.gmra.mxu0 %v362
        %v426 = vpop.f32.mrf.mxu0
        %v427 = vadd.f32 %v257, %v426
        %v428 = vpop.f32.mrf.mxu0
        %v429 = vadd.f32 %v257, %v428
        %430 = vmatmul.bf16.gmra.mxu0 %v365
        %v431 = vpop.f32.mrf.mxu0
        %v432 = vadd.f32 %v257, %v431
        %v433 = vpop.f32.mrf.mxu0
        %v434 = vadd.f32 %v257, %v433
        %435 = vmatmul.bf16.gmra.mxu0 %v368
        %v436 = vpop.f32.mrf.mxu0
        %v437 = vadd.f32 %v257, %v436
        %v438 = vpop.f32.mrf.mxu0
        %v439 = vadd.f32 %v257, %v438
        %440 = vmatmul.bf16.gmra.mxu0 %v371
        %v441 = vpop.f32.mrf.mxu0
        %v442 = vadd.f32 %v257, %v441
        %v443 = vpop.f32.mrf.mxu0
        %v444 = vadd.f32 %v257, %v443
        %445 = vmatmul.bf16.gmra.mxu0 %v374
        %v446 = vpop.f32.mrf.mxu0
        %v447 = vadd.f32 %v257, %v446
        %v448 = vpop.f32.mrf.mxu0
        %v449 = vadd.f32 %v257, %v448
        %450 = vmatmul.bf16.gmra.mxu0 %v377
        %v451 = vpop.f32.mrf.mxu0
        %v452 = vadd.f32 %v257, %v451
        %v453 = vpop.f32.mrf.mxu0
        %v454 = vadd.f32 %v257, %v453
        %455 = vmatmul.bf16.gmra.mxu0 %v380
        %v456 = vpop.f32.mrf.mxu0
        %v457 = vadd.f32 %v257, %v456
        %v458 = vpop.f32.mrf.mxu0
        %v459 = vadd.f32 %v257, %v458
        %460 = vmatmul.bf16.gmra.mxu0 %v383
        %v461 = vpop.f32.mrf.mxu0
        %v462 = vadd.f32 %v257, %v461
        %v463 = vpop.f32.mrf.mxu0
        %v464 = vadd.f32 %v257, %v463
        %465 = vmatmul.bf16.gmra.mxu0 %v386
        %v466 = vpop.f32.mrf.mxu0
        %v467 = vadd.f32 %v257, %v466
        %v468 = vpop.f32.mrf.mxu0
        %v469 = vadd.f32 %v257, %v468
        %470 = vmatmul.bf16.gmra.mxu0 %v389
        %v471 = vpop.f32.mrf.mxu0
        %v472 = vadd.f32 %v257, %v471
        %v473 = vpop.f32.mrf.mxu0
        %v474 = vadd.f32 %v257, %v473
        %475 = vmatmul.bf16.gmra.mxu0 %v392
        %v476 = vpop.f32.mrf.mxu0
        %v477 = vadd.f32 %v257, %v476
        %v478 = vpop.f32.mrf.mxu0
        %v479 = vadd.f32 %v257, %v478
        %480 = vmatmul.bf16.gmra.mxu0 %v395
        %v481 = vpop.f32.mrf.mxu0
        %v482 = vadd.f32 %v257, %v481
        %v483 = vpop.f32.mrf.mxu0
        %v484 = vadd.f32 %v257, %v483
        %485 = vmatmul.bf16.gmra.mxu0 %v398
        %v486 = vpop.f32.mrf.mxu0
        %v487 = vadd.f32 %v257, %v486
        %v488 = vpop.f32.mrf.mxu0
        %v489 = vadd.f32 %v257, %v488
        %490 = vmatmul.bf16.gmra.mxu0 %v401
        %v491 = vpop.f32.mrf.mxu0
        %v492 = vadd.f32 %v257, %v491
        %v493 = vpop.f32.mrf.mxu0
        %v494 = vadd.f32 %v257, %v493
        %495 = vdwg.mxu0
        %v496 = vadd.f32 %v417, 3.0
        %v497 = vadd.f32 %v419, 3.0
        %v498 = vadd.f32 %v422, 3.0
        %v499 = vadd.f32 %v424, 3.0
        %v500 = vadd.f32 %v427, 3.0
        %v501 = vadd.f32 %v429, 3.0
        %v502 = vadd.f32 %v432, 3.0
        %v503 = vadd.f32 %v434, 3.0
        %v504 = vadd.f32 %v437, 3.0
        %v505 = vadd.f32 %v439, 3.0
        %v506 = vadd.f32 %v442, 3.0
        %v507 = vadd.f32 %v444, 3.0
        %v508 = vadd.f32 %v447, 3.0
        %v509 = vadd.f32 %v449, 3.0
        %v510 = vadd.f32 %v452, 3.0
        %v511 = vadd.f32 %v454, 3.0
        %v512 = vadd.f32 %v457, 3.0
        %v513 = vadd.f32 %v459, 3.0
        %v514 = vadd.f32 %v462, 3.0
        %v515 = vadd.f32 %v464, 3.0
        %v516 = vadd.f32 %v467, 3.0
        %v517 = vadd.f32 %v469, 3.0
        %v518 = vadd.f32 %v472, 3.0
        %v519 = vadd.f32 %v474, 3.0
        %v520 = vadd.f32 %v477, 3.0
        %v521 = vadd.f32 %v479, 3.0
        %v522 = vadd.f32 %v482, 3.0
        %v523 = vadd.f32 %v484, 3.0
        %v524 = vadd.f32 %v487, 3.0
        %v525 = vadd.f32 %v489, 3.0
        %v526 = vadd.f32 %v492, 3.0
        %v527 = vadd.f32 %v494, 3.0
        %v528 = vmax.f32 %v496, 0.0
        %v529 = vmax.f32 %v497, 0.0
        %v530 = vmax.f32 %v498, 0.0
        %v531 = vmax.f32 %v499, 0.0
        %v532 = vmax.f32 %v500, 0.0
        %v533 = vmax.f32 %v501, 0.0
        %v534 = vmax.f32 %v502, 0.0
        %v535 = vmax.f32 %v503, 0.0
        %v536 = vmax.f32 %v504, 0.0
        %v537 = vmax.f32 %v505, 0.0
        %v538 = vmax.f32 %v506, 0.0
        %v539 = vmax.f32 %v507, 0.0
        %v540 = vmax.f32 %v508, 0.0
        %v541 = vmax.f32 %v509, 0.0
        %v542 = vmax.f32 %v510, 0.0
        %v543 = vmax.f32 %v511, 0.0
        %v544 = vmax.f32 %v512, 0.0
        %v545 = vmax.f32 %v513, 0.0
        %v546 = vmax.f32 %v514, 0.0
        %v547 = vmax.f32 %v515, 0.0
        %v548 = vmax.f32 %v516, 0.0
        %v549 = vmax.f32 %v517, 0.0
        %v550 = vmax.f32 %v518, 0.0
        %v551 = vmax.f32 %v519, 0.0
        %v552 = vmax.f32 %v520, 0.0
        %v553 = vmax.f32 %v521, 0.0
        %v554 = vmax.f32 %v522, 0.0
        %v555 = vmax.f32 %v523, 0.0
        %v556 = vmax.f32 %v524, 0.0
        %v557 = vmax.f32 %v525, 0.0
        %v558 = vmax.f32 %v526, 0.0
        %v559 = vmax.f32 %v527, 0.0
        %v560 = vmin.f32 %v528, 6.0
        %v561 = vmin.f32 %v529, 6.0
        %v562 = vmin.f32 %v530, 6.0
        %v563 = vmin.f32 %v531, 6.0
        %v564 = vmin.f32 %v532, 6.0
        %v565 = vmin.f32 %v533, 6.0
        %v566 = vmin.f32 %v534, 6.0
        %v567 = vmin.f32 %v535, 6.0
        %v568 = vmin.f32 %v536, 6.0
        %v569 = vmin.f32 %v537, 6.0
        %v570 = vmin.f32 %v538, 6.0
        %v571 = vmin.f32 %v539, 6.0
        %v572 = vmin.f32 %v540, 6.0
        %v573 = vmin.f32 %v541, 6.0
        %v574 = vmin.f32 %v542, 6.0
        %v575 = vmin.f32 %v543, 6.0
        %v576 = vmin.f32 %v544, 6.0
        %v577 = vmin.f32 %v545, 6.0
        %v578 = vmin.f32 %v546, 6.0
        %v579 = vmin.f32 %v547, 6.0
        %v580 = vmin.f32 %v548, 6.0
        %v581 = vmin.f32 %v549, 6.0
        %v582 = vmin.f32 %v550, 6.0
        %v583 = vmin.f32 %v551, 6.0
        %v584 = vmin.f32 %v552, 6.0
        %v585 = vmin.f32 %v553, 6.0
        %v586 = vmin.f32 %v554, 6.0
        %v587 = vmin.f32 %v555, 6.0
        %v588 = vmin.f32 %v556, 6.0
        %v589 = vmin.f32 %v557, 6.0
        %v590 = vmin.f32 %v558, 6.0
        %v591 = vmin.f32 %v559, 6.0
        %v592 = vmul.f32 %v417, %v560
        %v593 = vmul.f32 %v419, %v561
        %v594 = vmul.f32 %v422, %v562
        %v595 = vmul.f32 %v424, %v563
        %v596 = vmul.f32 %v427, %v564
        %v597 = vmul.f32 %v429, %v565
        %v598 = vmul.f32 %v432, %v566
        %v599 = vmul.f32 %v434, %v567
        %v600 = vmul.f32 %v437, %v568
        %v601 = vmul.f32 %v439, %v569
        %v602 = vmul.f32 %v442, %v570
        %v603 = vmul.f32 %v444, %v571
        %v604 = vmul.f32 %v447, %v572
        %v605 = vmul.f32 %v449, %v573
        %v606 = vmul.f32 %v452, %v574
        %v607 = vmul.f32 %v454, %v575
        %v608 = vmul.f32 %v457, %v576
        %v609 = vmul.f32 %v459, %v577
        %v610 = vmul.f32 %v462, %v578
        %v611 = vmul.f32 %v464, %v579
        %v612 = vmul.f32 %v467, %v580
        %v613 = vmul.f32 %v469, %v581
        %v614 = vmul.f32 %v472, %v582
        %v615 = vmul.f32 %v474, %v583
        %v616 = vmul.f32 %v477, %v584
        %v617 = vmul.f32 %v479, %v585
        %v618 = vmul.f32 %v482, %v586
        %v619 = vmul.f32 %v484, %v587
        %v620 = vmul.f32 %v487, %v588
        %v621 = vmul.f32 %v489, %v589
        %v622 = vmul.f32 %v492, %v590
        %v623 = vmul.f32 %v494, %v591
        %v624 = vmul.f32 %v592, 0.16666667
        %v625 = vmul.f32 %v593, 0.16666667
        %v626 = vmul.f32 %v594, 0.16666667
        %v627 = vmul.f32 %v595, 0.16666667
        %v628 = vmul.f32 %v596, 0.16666667
        %v629 = vmul.f32 %v597, 0.16666667
        %v630 = vmul.f32 %v598, 0.16666667
        %v631 = vmul.f32 %v599, 0.16666667
        %v632 = vmul.f32 %v600, 0.16666667
        %v633 = vmul.f32 %v601, 0.16666667
        %v634 = vmul.f32 %v602, 0.16666667
        %v635 = vmul.f32 %v603, 0.16666667
        %v636 = vmul.f32 %v604, 0.16666667
        %v637 = vmul.f32 %v605, 0.16666667
        %v638 = vmul.f32 %v606, 0.16666667
        %v639 = vmul.f32 %v607, 0.16666667
        %v640 = vmul.f32 %v608, 0.16666667
        %v641 = vmul.f32 %v609, 0.16666667
        %v642 = vmul.f32 %v610, 0.16666667
        %v643 = vmul.f32 %v611, 0.16666667
        %v644 = vmul.f32 %v612, 0.16666667
        %v645 = vmul.f32 %v613, 0.16666667
        %v646 = vmul.f32 %v614, 0.16666667
        %v647 = vmul.f32 %v615, 0.16666667
        %v648 = vmul.f32 %v616, 0.16666667
        %v649 = vmul.f32 %v617, 0.16666667
        %v650 = vmul.f32 %v618, 0.16666667
        %v651 = vmul.f32 %v619, 0.16666667
        %v652 = vmul.f32 %v620, 0.16666667
        %v653 = vmul.f32 %v621, 0.16666667
        %v654 = vmul.f32 %v622, 0.16666667
        %v655 = vmul.f32 %v623, 0.16666667
        %656 = vst [vmem:[%s202] sm:$0xff] %v624
        %657 = vst [vmem:[%s202 + $0x8] sm:$0xff] %v625
        %658 = vst [vmem:[%s202 + $0x10] sm:$0xff] %v626
        %659 = vst [vmem:[%s202 + $0x18] sm:$0xff] %v627
        %660 = vst [vmem:[%s202 + $0x20] sm:$0xff] %v628
        %661 = vst [vmem:[%s202 + $0x28] sm:$0xff] %v629
        %662 = vst [vmem:[%s202 + $0x30] sm:$0xff] %v630
        %663 = vst [vmem:[%s202 + $0x38] sm:$0xff] %v631
        %664 = vst [vmem:[%s202 + $0x40] sm:$0xff] %v632
        %665 = vst [vmem:[%s202 + $0x48] sm:$0xff] %v633
        %666 = vst [vmem:[%s202 + $0x50] sm:$0xff] %v634
        %667 = vst [vmem:[%s202 + $0x58] sm:$0xff] %v635
        %668 = vst [vmem:[%s202 + $0x60] sm:$0xff] %v636
        %669 = vst [vmem:[%s202 + $0x68] sm:$0xff] %v637
        %670 = vst [vmem:[%s202 + $0x70] sm:$0xff] %v638
        %671 = vst [vmem:[%s202 + $0x78] sm:$0xff] %v639
        %672 = vst [vmem:[%s202 + $0x80] sm:$0xff] %v640
        %673 = vst [vmem:[%s202 + $0x88] sm:$0xff] %v641
        %674 = vst [vmem:[%s202 + $0x90] sm:$0xff] %v642
        %675 = vst [vmem:[%s202 + $0x98] sm:$0xff] %v643
        %676 = vst [vmem:[%s202 + $0xa0] sm:$0xff] %v644
        %677 = vst [vmem:[%s202 + $0xa8] sm:$0xff] %v645
        %678 = vst [vmem:[%s202 + $0xb0] sm:$0xff] %v646
        %679 = vst [vmem:[%s202 + $0xb8] sm:$0xff] %v647
        %680 = vst [vmem:[%s202 + $0xc0] sm:$0xff] %v648
        %681 = vst [vmem:[%s202 + $0xc8] sm:$0xff] %v649
        %682 = vst [vmem:[%s202 + $0xd0] sm:$0xff] %v650
        %683 = vst [vmem:[%s202 + $0xd8] sm:$0xff] %v651
        %684 = vst [vmem:[%s202 + $0xe0] sm:$0xff] %v652
        %685 = vst [vmem:[%s202 + $0xe8] sm:$0xff] %v653
        %686 = vst [vmem:[%s202 + $0xf0] sm:$0xff] %v654
        %687 = vst [vmem:[%s202 + $0xf8] sm:$0xff] %v655
        %s688 = sand.u32 %s117, 1
        %s689 = scalar_lea.sflag [#allocation3], %s688
        %s690 = sand.u32 %s117, 1
        %s691 = smul.addr %s690, 256
        %s692 = scalar_lea.vmem [#allocation2], %s691
        // Predicated region
        $region33: #{tpu_custom_call.1} parent=31 // pred_check
          %p693 = pneg %p127
        $region34: #{tpu_custom_call.1} parent=31 // pred_check_branch
          %695 = sbr.rel (%p693) target = $region36
        $region35: #{tpu_custom_call.1} parent=31 // pred_region
          %s696 = smul.u32 32, %s21
          %698 = vsyncadd %s689, 0
          %s699 = sadd.s32 %s22, %s696
          %s700 = smul.addr %s699, 8
          %s701 = scalar_lea.hbm %s3, %s700
          %s702 = sshll.u32 %s692, 4
          %s703 = int_to_ptr.vmem [resolvable:$true] %s702
          %s704 = sshll.u32 %s701, 4
          %s705 = int_to_ptr.hbm [resolvable:$true] %s704
          %710 = dma.vmem_to_hbm [thread:$0]  %s703, 4096, %s705, %s689, 128, 128, 8
        $region36: #{tpu_custom_call.1} parent=31 // pred_fallthru
          _
      $region32: #{tpu_custom_call.1} parent=5 // pred_fallthru
        _
      %p711 = scmp.le.s32.totalorder 2, %s12
      // Predicated region
      $region37: #{tpu_custom_call.1} parent=5 // pred_check
        %p712 = pneg %p711
      $region38: #{tpu_custom_call.1} parent=5 // pred_check_branch
        %714 = sbr.rel (%p712) target = $region40
      $region39: #{tpu_custom_call.1} parent=5 // pred_region
        %s715 = ssub.s32 %s12, 2
        // Predicated region
        $region41: #{tpu_custom_call.1} parent=39 // pred_check
          %p716 = pneg %p133
        $region42: #{tpu_custom_call.1} parent=39 // pred_check_branch
          %718 = sbr.rel (%p716) target = $region44
        $region43: #{tpu_custom_call.1} parent=39 // pred_region
          %s719 = sand.u32 %s118, 1
          %s720 = scalar_lea.sflag [#allocation3], %s719
          %s721 = sand.u32 %s118, 1
          %s722 = smul.addr %s721, 256
          %s723 = scalar_lea.vmem [#allocation2], %s722
          %725 = dma.done %s720, 4096
        $region44: #{tpu_custom_call.1} parent=39 // pred_fallthru
          _
      $region40: #{tpu_custom_call.1} parent=5 // pred_fallthru
        _
    $region6: #{tpu_custom_call.1} parent=1 // loop_footer
      %s16 = sadd.s32 1, %s12
    $region7: #{tpu_custom_call.1} parent=1 // loop_footer_branch
      %11 = sbr.rel target = $region3
    $region8: #{tpu_custom_call.1} parent=1 // loop_exit
      _
    %726 = vsyncpa [#allocation3], 1
    %s727 = scalar_lea.sflag [#allocation3], 1
    %728 = vsyncpa %s727, 1

</llo_original>
